<compile_context>
chip_gen: v7x
topology: tpu7x:2x2x1
jax: 0.10.0
libtpu: 0.0.40
codegen_flags: <defaults>
</compile_context>

<pallas_src>
import functools

import jax
import jax.numpy as jnp
from jax.experimental import pallas as pl
from jax.experimental.pallas import tpu as pltpu

_LANES = 128

# Older jax releases exposed this dataclass as TPUCompilerParams.
_CompilerParams = getattr(pltpu, "CompilerParams", None) or getattr(
    pltpu, "TPUCompilerParams")


def head_kernel(x_ref, w_ref, b_ref, o_ref):
    """Fused (packed) matmul + bias + ReLU for one batch tile."""
    acc = jnp.dot(x_ref[...], w_ref[...], preferred_element_type=jnp.float32)
    acc = acc + b_ref[...].astype(jnp.float32)   # (1, Fs) broadcast over rows
    o_ref[...] = jnp.maximum(acc, 0.0).astype(o_ref.dtype)


def _pack_factor(feat_size):
    """How many logical output rows fit into one 128-lane-dense row."""
    if feat_size < _LANES and _LANES % feat_size == 0:
        return _LANES // feat_size
    # feat_size does not divide 128: output falls back to lane-sparse masked
    # stores (perf regression only, math still exact).
    return 1


def _pack_params(w, b, pack):
    """Block-diagonal weight / tiled bias so `pack` logical batch rows share
    one 128-lane output row.  Padded entries are exact zeros -> exact math."""
    K, F = w.shape
    if pack == 1:
        return w, b.reshape(1, F)
    w_big = jnp.kron(jnp.eye(pack, dtype=w.dtype), w)   # (pack*K, pack*F)
    b_big = jnp.tile(b.reshape(1, F), (1, pack))
    return w_big, b_big


def _choose_tm(Bs, pack, block_rows):
    """Batch tile (in packed rows): as big as block_rows allows, rounded to
    the (8,128) tiling rule, but keeping >=2 grid steps when possible so the
    'parallel' batch axis can shard across v7x's two TensorCores."""
    if Bs <= 8:
        return Bs                                  # single full-extent block
    tm = min(max(8, block_rows // pack), Bs)
    if Bs >= 16:
        half = ((pl.cdiv(Bs, 2) + 7) // 8) * 8
        tm = min(tm, half)
    if tm != Bs and tm % 8:
        tm = max(8, (tm // 8) * 8)
    return tm


def _packed_call(x_packed, w_packed, b_packed, pack, block_rows):
    Bs, Ks = x_packed.shape
    Fs = w_packed.shape[1]
    tm = _choose_tm(Bs, pack, block_rows)
    grid = (pl.cdiv(Bs, tm),)

    itemsize = jnp.dtype(x_packed.dtype).itemsize
    w_itemsize = jnp.dtype(w_packed.dtype).itemsize
    # Double-buffered x/out tiles + (double-buffered) resident weight/bias.
    vmem_need = 2 * tm * (Ks + Fs) * itemsize + 2 * (Ks * Fs + Fs) * w_itemsize
    vmem_limit = int(min(64 << 20, max(32 << 20, 2 * vmem_need)))

    cost = pl.CostEstimate(
        flops=2 * Bs * Ks * Fs,
        transcendentals=0,
        bytes_accessed=itemsize * (Bs * Ks + Ks * Fs + Fs + Bs * Fs))

    return pl.pallas_call(
        head_kernel,
        out_shape=jax.ShapeDtypeStruct((Bs, Fs), x_packed.dtype),
        grid=grid,
        in_specs=[
            pl.BlockSpec((tm, Ks), lambda i: (i, 0)),   # x tile, pipelined
            pl.BlockSpec((Ks, Fs), lambda i: (0, 0)),   # weight, resident
            pl.BlockSpec((1, Fs), lambda i: (0, 0)),    # bias, resident
        ],
        out_specs=pl.BlockSpec((tm, Fs), lambda i: (i, 0)),
        compiler_params=_CompilerParams(
            dimension_semantics=("parallel",),
            vmem_limit_bytes=vmem_limit),
        cost_estimate=cost,
    )(x_packed, w_packed, b_packed)


@functools.partial(jax.jit, static_argnames=("pack", "feat_size", "block_rows"))
def _head_forward(x, w_packed, b_packed, *, pack, feat_size, block_rows):
    """x: (B, K) -> ReLU(x @ w + b) of shape (B, feat_size)."""
    B, K = x.shape
    F = feat_size
    nfull = (B // pack) * pack

    if nfull == B:
        # Zero-copy path: row-major (B, K) -> (B/pack, pack*K) is a bitcast.
        x_packed = x.reshape(B // pack, pack * K)
        out = _packed_call(x_packed, w_packed, b_packed, pack, block_rows)
        return out.reshape(B, F)                   # free contiguous reshape

    # Ragged batch (B % pack != 0): packed kernel over the body rows; the
    # < pack leftover rows are tiny, so compute them with plain XLA instead of
    # padding the full input and slicing the full output (avoids ~2x HBM).
    outs = []
    if nfull:
        body = x[:nfull].reshape(nfull // pack, pack * K)
        outs.append(
            _packed_call(body, w_packed, b_packed, pack, block_rows)
            .reshape(nfull, F))
    tail = x[nfull:]
    w0 = w_packed[:K, :F]          # original weight = top-left diagonal block
    b0 = b_packed[0, :F]
    outs.append(jnp.maximum(tail @ w0 + b0[None, :], 0.0).astype(x.dtype))
    return jnp.concatenate(outs, axis=0)


def make_head(w, b, *, block_rows=8192):
    """Pack parameters ONCE (eagerly, outside jit) and return a forward fn."""
    K, F = w.shape
    assert b.shape == (F,), (b.shape, F)
    pack = _pack_factor(F)
    w_p, b_p = _pack_params(w, b, pack)            # built once, not per call
    w_p = jax.device_put(w_p)
    b_p = jax.device_put(b_p)

    def forward(x, *, block_rows=block_rows):
        return _head_forward(x, w_p, b_p, pack=pack, feat_size=F,
                             block_rows=block_rows)

    return forward


if __name__ == "__main__":
    # args.hidden_size = 32 -> in_features = 64, args.feat_size = 32
    hidden_size = 32
    feat_size = 32
    in_features = hidden_size * 2

    key = jax.random.PRNGKey(0)
    kw, kb, kx1, kx2, kx3, kx4 = jax.random.split(key, 6)

    # Deterministic parameter init (synthetic; mimics Linear's uniform range).
    bound = 1.0 / (in_features ** 0.5)
    w = jax.random.uniform(kw, (in_features, feat_size), dtype=jnp.float32,
                           minval=-bound, maxval=bound)
    b = jax.random.uniform(kb, (feat_size,), dtype=jnp.float32,
                           minval=-bound, maxval=bound)

    head = make_head(w, b)

    def ref_fn(x):
        return jnp.maximum(x @ w + b[None, :], 0.0)

    # Case 1: typical deployment batch, divisible by pack (zero-copy path).
    x1 = jax.random.normal(kx1, (8, in_features), dtype=jnp.float32)
    o1 = head(x1)
    jax.block_until_ready(o1)
    assert o1.shape == (8, feat_size)
    assert jnp.allclose(o1, ref_fn(x1), atol=1e-5, rtol=1e-5)

    # Case 2: ragged batch (B % pack != 0) -> body via kernel, tail via XLA.
    x2 = jax.random.normal(kx2, (10, in_features), dtype=jnp.float32)
    o2 = head(x2)
    jax.block_until_ready(o2)
    assert o2.shape == (10, feat_size)
    assert jnp.allclose(o2, ref_fn(x2), atol=1e-5, rtol=1e-5)

    # Case 3: small block_rows -> multi-step grid + partial last block.
    x3 = jax.random.normal(kx3, (40, in_features), dtype=jnp.float32)
    o3 = head(x3, block_rows=16)
    jax.block_until_ready(o3)
    assert o3.shape == (40, feat_size)
    assert jnp.allclose(o3, ref_fn(x3), atol=1e-5, rtol=1e-5)

    # Case 4: batch large enough that the >=2-grid-step (megacore) cap kicks in.
    x4 = jax.random.normal(kx4, (128, in_features), dtype=jnp.float32)
    o4 = head(x4)
    jax.block_until_ready(o4)
    assert o4.shape == (128, feat_size)
    assert jnp.allclose(o4, ref_fn(x4), atol=1e-5, rtol=1e-5)

    print("KERNEL_OK")
</pallas_src>

<mosaic_0001>
module attributes {stable_mosaic.version = 11 : i64} {
  func.func @head_kernel(%arg0: i32, %arg1: memref<2x256xf32, #tpu.memory_space<vmem>>, %arg2: memref<256x128xf32, #tpu.memory_space<vmem>>, %arg3: memref<1x128xf32, #tpu.memory_space<vmem>>, %arg4: memref<2x128xf32, #tpu.memory_space<vmem>>) attributes {dimension_semantics = [#tpu.dimension_semantics<parallel>], iteration_bounds = array<i64: 1>, scalar_prefetch = 0 : i64, scratch_operands = 0 : i64, tpu.core_type = #tpu.core_type<tc>, window_params = [{transform_indices = @transform_0, window_bounds = array<i64: 2, 256>}, {pipeline_mode = #tpu.pipeline_mode<synchronous>, transform_indices = @transform_1, window_bounds = array<i64: 256, 128>}, {pipeline_mode = #tpu.pipeline_mode<synchronous>, transform_indices = @transform_2, window_bounds = array<i64: 1, 128>}, {transform_indices = @transform_3, window_bounds = array<i64: 2, 128>}]} {
    %c0 = arith.constant 0 : index
    %c0_0 = arith.constant 0 : index
    %0 = vector.load %arg1[%c0, %c0_0] : memref<2x256xf32, #tpu.memory_space<vmem>>, vector<2x256xf32>
    %c0_1 = arith.constant 0 : index
    %c0_2 = arith.constant 0 : index
    %1 = vector.load %arg2[%c0_1, %c0_2] : memref<256x128xf32, #tpu.memory_space<vmem>>, vector<256x128xf32>
    %cst = arith.constant dense<0.000000e+00> : vector<2x128xf32>
    %2 = tpu.matmul %0, %1, %cst {dimension_numbers = #tpu.dot_dimension_numbers<[1], [0], [0], [1], [0, 0, 1, 1], [], []>} : vector<2x256xf32>, vector<256x128xf32>, vector<2x128xf32> -> vector<2x128xf32>
    %c0_3 = arith.constant 0 : index
    %c0_4 = arith.constant 0 : index
    %3 = vector.load %arg3[%c0_3, %c0_4] : memref<1x128xf32, #tpu.memory_space<vmem>>, vector<1x128xf32>
    %4 = vector.broadcast %3 : vector<1x128xf32> to vector<2x128xf32>
    %5 = arith.addf %2, %4 : vector<2x128xf32>
    %cst_5 = arith.constant 0.000000e+00 : f32
    %6 = vector.broadcast %cst_5 : f32 to vector<2x128xf32>
    %7 = arith.maximumf %5, %6 : vector<2x128xf32>
    %c0_6 = arith.constant 0 : index
    %c0_7 = arith.constant 0 : index
    %8 = vector.load %arg4[%c0_6, %c0_7] : memref<2x128xf32, #tpu.memory_space<vmem>>, vector<2x128xf32>
    tpu.vector_store %arg4[%c0_6, %c0_7], %7 {strides = array<i32>} : memref<2x128xf32, #tpu.memory_space<vmem>>, vector<2x128xf32>,
    return
  }
  func.func @transform_0(%arg0: i32) -> (i32, i32) {
    %c0_i32 = arith.constant 0 : i32
    %c0_i32_0 = arith.constant 0 : i32
    return %arg0, %c0_i32 : i32, i32
  }
  func.func @transform_1(%arg0: i32) -> (i32, i32) {
    %c0_i32 = arith.constant 0 : i32
    %c0_i32_0 = arith.constant 0 : i32
    %c0_i32_1 = arith.constant 0 : i32
    return %c0_i32, %c0_i32_0 : i32, i32
  }
  func.func @transform_2(%arg0: i32) -> (i32, i32) {
    %c0_i32 = arith.constant 0 : i32
    %c0_i32_0 = arith.constant 0 : i32
    %c0_i32_1 = arith.constant 0 : i32
    return %c0_i32, %c0_i32_0 : i32, i32
  }
  func.func @transform_3(%arg0: i32) -> (i32, i32) {
    %c0_i32 = arith.constant 0 : i32
    %c0_i32_0 = arith.constant 0 : i32
    return %arg0, %c0_i32 : i32, i32
  }
}

</mosaic_0001>

<llo_original>
// kernel: _head_forward.1
$region0: #{_head_forward.1}
  #allocation0 [shape = 'u32[]', space=smem, size = 0x4, offset = 0x4, fixed_abs, tag = 'smem constant byte address 0x4 - core index']
  #allocation1 [shape = 'u32[144,128]{1,0:T(1,128)}', space=vmem, size = 0x12000, scoped, tag = 'internal scratch']
  %s0 = inlined_call_operand.vmem [shape: f32[2,256], index: 0, kind: input, shape index: {}]
  %s1 = inlined_call_operand.hbm [shape: f32[256,128], index: 1, kind: input, shape index: {}]
  %s2 = inlined_call_operand.vmem [shape: f32[1,128], index: 2, kind: input, shape index: {}]
  %s3 = inlined_call_operand.vmem [shape: f32[2,128], index: 3, kind: output, shape index: {}]
  %s4 = sld [smem:[#allocation0]]
  $region26: #{_head_forward.1} parent=0
    _
  %s6 = ssub.s32 1, %s4
  %s7 = scalar_select 0, %s6, %s4
  $region1: #{_head_forward.1} parent=0
    #allocation2 [shape = 'u8[131072]{0}', space=vmem, size = 0x20000, scoped, tag = 'input window, operand 1, single buffered']
    #allocation3 [shape = 's32[1]{0}', space=sflag, size = 0x4, scoped, tag = 'scoped memory for _head_forward.1']
    %8 = vsyncpa [#allocation3], 0
    // Predicated region
    $region2: #{_head_forward.1} parent=1 // pred_check
      _
    $region3: #{_head_forward.1} parent=1 // pred_check_branch
      %10 = sbr.rel (0) target = $region5
    $region4: #{_head_forward.1} parent=1 // pred_region
      _
    $region5: #{_head_forward.1} parent=1 // pred_fallthru
      _
    // Predicated region
    $region6: #{_head_forward.1} parent=1 // pred_check
      _
    $region7: #{_head_forward.1} parent=1 // pred_check_branch
      %12 = sbr.rel (0) target = $region9
    $region8: #{_head_forward.1} parent=1 // pred_region
      %s14 = ssub.s32 4096, 4096
      %15 = vsyncadd [#allocation3], %s14
      %s16 = sshll.u32 [#allocation2], 4
      %s17 = int_to_ptr.vmem [resolvable:$true] %s16
      %22 = dma.hbm_to_vmem [thread:$0]  %s1, 4096, %s17, [#allocation3], 128, 128, 8
    $region9: #{_head_forward.1} parent=1 // pred_fallthru
      _
    // Predicated region
    $region10: #{_head_forward.1} parent=1 // pred_check
      _
    $region11: #{_head_forward.1} parent=1 // pred_check_branch
      %24 = sbr.rel (0) target = $region13
    $region12: #{_head_forward.1} parent=1 // pred_region
      _
    $region13: #{_head_forward.1} parent=1 // pred_fallthru
      _
    // Predicated region
    $region14: #{_head_forward.1} parent=1 // pred_check
      _
    $region15: #{_head_forward.1} parent=1 // pred_check_branch
      %26 = sbr.rel (0) target = $region17
    $region16: #{_head_forward.1} parent=1 // pred_region
      %27 = dma.done [#allocation3], 4096
    $region17: #{_head_forward.1} parent=1 // pred_fallthru
      _
    %v28 = vld [vmem:[%s0] sm:$0xf]
    %v29 = vld [vmem:[#allocation2] sm:$0xff]
    %v30 = vld [vmem:[#allocation2 + $0x8] sm:$0xff]
    %v31 = vld [vmem:[#allocation2 + $0x10] sm:$0xff]
    %v32 = vld [vmem:[#allocation2 + $0x18] sm:$0xff]
    %v33 = vld [vmem:[#allocation2 + $0x20] sm:$0xff]
    %v34 = vld [vmem:[#allocation2 + $0x28] sm:$0xff]
    %v35 = vld [vmem:[#allocation2 + $0x30] sm:$0xff]
    %v36 = vld [vmem:[#allocation2 + $0x38] sm:$0xff]
    %v37 = vld [vmem:[#allocation2 + $0x40] sm:$0xff]
    %v38 = vld [vmem:[#allocation2 + $0x48] sm:$0xff]
    %v39 = vld [vmem:[#allocation2 + $0x50] sm:$0xff]
    %v40 = vld [vmem:[#allocation2 + $0x58] sm:$0xff]
    %v41 = vld [vmem:[#allocation2 + $0x60] sm:$0xff]
    %v42 = vld [vmem:[#allocation2 + $0x68] sm:$0xff]
    %v43 = vld [vmem:[#allocation2 + $0x70] sm:$0xff]
    %v44 = vld [vmem:[#allocation2 + $0x78] sm:$0xff]
    %v45 = vld [vmem:[#allocation2 + $0x80] sm:$0xff]
    %v46 = vld [vmem:[#allocation2 + $0x88] sm:$0xff]
    %v47 = vld [vmem:[#allocation2 + $0x90] sm:$0xff]
    %v48 = vld [vmem:[#allocation2 + $0x98] sm:$0xff]
    %v49 = vld [vmem:[#allocation2 + $0xa0] sm:$0xff]
    %v50 = vld [vmem:[#allocation2 + $0xa8] sm:$0xff]
    %v51 = vld [vmem:[#allocation2 + $0xb0] sm:$0xff]
    %v52 = vld [vmem:[#allocation2 + $0xb8] sm:$0xff]
    %v53 = vld [vmem:[#allocation2 + $0xc0] sm:$0xff]
    %v54 = vld [vmem:[#allocation2 + $0xc8] sm:$0xff]
    %v55 = vld [vmem:[#allocation2 + $0xd0] sm:$0xff]
    %v56 = vld [vmem:[#allocation2 + $0xd8] sm:$0xff]
    %v57 = vld [vmem:[#allocation2 + $0xe0] sm:$0xff]
    %v58 = vld [vmem:[#allocation2 + $0xe8] sm:$0xff]
    %v59 = vld [vmem:[#allocation2 + $0xf0] sm:$0xff]
    %v60 = vld [vmem:[#allocation2 + $0xf8] sm:$0xff]
    %v61 = vld [vmem:[%s2] sm:$0x1]
    %v63 = vlaneseq
    %v64 = vshrl.u32 %v63, 7
    %v65 = vsub.s32 0, %v64
    %v66 = vrot.slane %v61, %v65
    %v70 = vunpack.c.l.s4 1983009808
    %v71 = vunpack.c.0.s8 %v70
    %v72 = vlaneseq
    %v73 = vshrl.u32 %v72, 7
    %v74 = vsub.s32 %v71, %v73
    %v75 = vrot.slane %v28, %v74
    %v76 = vcombine.high %v75, %v75
    %79 = vmatprep.subr.mxu0 0.0
    %80 = vmatpush1.msra.mxu0 %v29
    %81 = vmatprep.subr.mxu0 0.0
    %82 = vmatpush1.msra.mxu0 %v30
    %83 = vmatprep.subr.mxu0 0.0
    %84 = vmatpush1.msra.mxu0 %v31
    %85 = vmatprep.subr.mxu0 0.0
    %86 = vmatpush1.msra.mxu0 %v32
    %87 = vmatprep.subr.mxu0 0.0
    %88 = vmatpush1.msra.mxu0 %v33
    %89 = vmatprep.subr.mxu0 0.0
    %90 = vmatpush1.msra.mxu0 %v34
    %91 = vmatprep.subr.mxu0 0.0
    %92 = vmatpush1.msra.mxu0 %v35
    %93 = vmatprep.subr.mxu0 0.0
    %94 = vmatpush1.msra.mxu0 %v36
    %95 = vmatprep.subr.mxu0 0.0
    %96 = vmatpush1.msra.mxu0 %v37
    %97 = vmatprep.subr.mxu0 0.0
    %98 = vmatpush1.msra.mxu0 %v38
    %99 = vmatprep.subr.mxu0 0.0
    %100 = vmatpush1.msra.mxu0 %v39
    %101 = vmatprep.subr.mxu0 0.0
    %102 = vmatpush1.msra.mxu0 %v40
    %103 = vmatprep.subr.mxu0 0.0
    %104 = vmatpush1.msra.mxu0 %v41
    %105 = vmatprep.subr.mxu0 0.0
    %106 = vmatpush1.msra.mxu0 %v42
    %107 = vmatprep.subr.mxu0 0.0
    %108 = vmatpush1.msra.mxu0 %v43
    %109 = vmatprep.subr.mxu0 0.0
    %110 = vmatpush1.msra.mxu0 %v44
    %111 = vmatprep.subr.mxu0 0.0
    %112 = vmatpush1.msra.mxu0 %v45
    %113 = vmatprep.subr.mxu0 0.0
    %114 = vmatpush1.msra.mxu0 %v46
    %115 = vmatprep.subr.mxu0 0.0
    %116 = vmatpush1.msra.mxu0 %v47
    %117 = vmatprep.subr.mxu0 0.0
    %118 = vmatpush1.msra.mxu0 %v48
    %119 = vmatprep.subr.mxu0 0.0
    %120 = vmatpush1.msra.mxu0 %v49
    %121 = vmatprep.subr.mxu0 0.0
    %122 = vmatpush1.msra.mxu0 %v50
    %123 = vmatprep.subr.mxu0 0.0
    %124 = vmatpush1.msra.mxu0 %v51
    %125 = vmatprep.subr.mxu0 0.0
    %126 = vmatpush1.msra.mxu0 %v52
    %127 = vmatprep.subr.mxu0 0.0
    %128 = vmatpush1.msra.mxu0 %v53
    %129 = vmatprep.subr.mxu0 0.0
    %130 = vmatpush1.msra.mxu0 %v54
    %131 = vmatprep.subr.mxu0 0.0
    %132 = vmatpush1.msra.mxu0 %v55
    %133 = vmatprep.subr.mxu0 0.0
    %134 = vmatpush1.msra.mxu0 %v56
    %135 = vmatprep.subr.mxu0 0.0
    %136 = vmatpush1.msra.mxu0 %v57
    %137 = vmatprep.subr.mxu0 0.0
    %138 = vmatpush1.msra.mxu0 %v58
    %139 = vmatprep.subr.mxu0 0.0
    %140 = vmatpush1.msra.mxu0 %v59
    %141 = vmatprep.subr.mxu0 0.0
    %142 = vmatpush1.msra.mxu0 %v60
    %143 = vmatprep.mubr.f32.mxu0 %v76
    %144 = vmatmul.mubr.f32.gmra.mrb[0].mxu0 %v75
    %v145 = vpop.f32.mrb[0].mxu0
    %v146 = vadd.f32 %v66, %v145
    %v147 = vpop.f32.mrb[0].mxu0
    %148 = vdwg.mxu0
    %v149 = vmax.f32 %v146, 0.0
    %150 = vst [vmem:[%s3] sm:$0x3] %v149
    // Predicated region
    $region18: #{_head_forward.1} parent=1 // pred_check
      _
    $region19: #{_head_forward.1} parent=1 // pred_check_branch
      %152 = sbr.rel (0) target = $region21
    $region20: #{_head_forward.1} parent=1 // pred_region
      _
    $region21: #{_head_forward.1} parent=1 // pred_fallthru
      _
    // Predicated region
    $region22: #{_head_forward.1} parent=1 // pred_check
      _
    $region23: #{_head_forward.1} parent=1 // pred_check_branch
      %154 = sbr.rel (0) target = $region25
    $region24: #{_head_forward.1} parent=1 // pred_region
      _
    $region25: #{_head_forward.1} parent=1 // pred_fallthru
      _
    %155 = vsyncpa [#allocation3], 1

</llo_original>
